<compile_context>
chip_gen: v7x
topology: tpu7x:2x2x1
jax: 0.10.0
libtpu: 0.0.40
codegen_flags: <defaults>
</compile_context>

<pallas_src>
import functools

import jax
import jax.numpy as jnp
import numpy as np
from jax.experimental import pallas as pl
from jax.experimental.pallas import tpu as pltpu

IN_FEATURES = 4
HIDDEN = 128
COL_LANES = 8          # lanes of the small f32 column slab: [W0(4) | b0 | b1 | w2 | b2]

# Batch-tile buckets.  Largest bucket (2048) keeps live VMEM at ~3-4 MB, safe on
# v5e (16 MiB scoped default), v6e (128 MiB) and v7x (64 MiB physical).
_TILE_BUCKETS = (128, 256, 512, 1024, 2048)


def _critic_kernel(x_ref, cs_ref, w1_ref, o_ref):
    """One batch tile of the full MLP forward, batch along lanes.

    x_ref : (4, TILE_B)    f32   states, transposed (feature-major)
    cs_ref: (128, 8)       f32   cols 0:4 = W0, col4 = b0, col5 = b1, col6 = w2, [0,7] = b2
    w1_ref: (128, 128)     bf16  W1 (out, in)
    o_ref : (1, TILE_B)    f32   values (lane-dense)
    """
    x = x_ref[...]                                 # (4, TB) f32
    w0 = cs_ref[:, 0:IN_FEATURES]                  # (128, 4) f32
    b0 = cs_ref[:, 4:5]                            # (128, 1)
    b1 = cs_ref[:, 5:6]                            # (128, 1)
    w2 = cs_ref[:, 6:7]                            # (128, 1)
    b2 = cs_ref[0:1, 7:8]                          # (1, 1)

    # Layer 0 (in=4): four broadcast multiply-adds on the VPU (f32).
    h0 = (w0[:, 0:1] * x[0:1, :]
          + w0[:, 1:2] * x[1:2, :]
          + w0[:, 2:3] * x[2:3, :]
          + w0[:, 3:4] * x[3:4, :]
          + b0)
    h0 = jnp.maximum(h0, 0.0)                      # (128, TB) f32, ReLU

    # Layer 1 (128x128): bf16 operands on the MXU, f32 accumulate, f32 bias/ReLU.
    h1 = jnp.dot(w1_ref[...], h0.astype(jnp.bfloat16),
                 preferred_element_type=jnp.float32) + b1
    h1 = jnp.maximum(h1, 0.0)                      # (128, TB) f32, ReLU

    # Head (128 -> 1): VPU multiply + sublane reduction in f32 (lane-dense result).
    o_ref[...] = jnp.sum(w2 * h1, axis=0, keepdims=True) + b2


def _round_up(n, m):
    return ((n + m - 1) // m) * m


def _pick_tile(n):
    """Largest bucket that still yields grid >= 2 for big n (keeps both v7x TCs busy);
    bucketing bounds the number of Mosaic compiles."""
    target = max(_TILE_BUCKETS[0], (n + 1) // 2)
    tile = _TILE_BUCKETS[0]
    for t in _TILE_BUCKETS:
        if t <= target:
            tile = t
    return tile


def _make_params(key):
    """Deterministic params matching nn.Linear default init, PyTorch (out, in) layout."""
    ks = jax.random.split(key, 6)

    def linear(kw, kb, fan_in, fan_out):
        bound = 1.0 / np.sqrt(fan_in)
        w = jax.random.uniform(kw, (fan_out, fan_in), jnp.float32, -bound, bound)
        b = jax.random.uniform(kb, (fan_out,), jnp.float32, -bound, bound)
        return w, b

    fc0 = linear(ks[0], ks[1], IN_FEATURES, HIDDEN)   # 4 -> 128
    fc1 = linear(ks[2], ks[3], HIDDEN, HIDDEN)        # 128 -> 128
    head = linear(ks[4], ks[5], HIDDEN, 1)            # 128 -> 1
    return fc0, fc1, head


def _pack_params(params):
    """Pack the six tensors into the two VMEM-resident slabs the kernel expects."""
    (w0, b0), (w1, b1), (w2, b2) = params
    col = jnp.zeros((HIDDEN, COL_LANES), jnp.float32)
    col = col.at[:, 0:IN_FEATURES].set(w0)            # W0 (128, 4)
    col = col.at[:, 4].set(b0)                        # b0
    col = col.at[:, 5].set(b1)                        # b1
    col = col.at[:, 6].set(w2[0])                     # final weights as a column
    col = col.at[0, 7].set(b2[0])                     # final bias (scalar)
    w1_bf16 = w1.astype(jnp.bfloat16)                 # (128, 128) bf16 for the MXU
    return col, w1_bf16


@functools.partial(jax.jit, static_argnames=("tile_b",))
def _forward_jit(states, col_slab, w1_slab, tile_b):
    """states: (N, 4) f32. Returns (N, 1) values via the Pallas kernel."""
    n = states.shape[0]
    n_pad = _round_up(n, tile_b)
    # Single fused pad + transpose to the lane-dense (features, batch) layout.
    xt = jnp.pad(states, ((0, n_pad - n), (0, 0))).T          # (4, n_pad)

    grid = (n_pad // tile_b,)
    flops = 2 * (IN_FEATURES * HIDDEN + HIDDEN * HIDDEN + HIDDEN) * n_pad
    bytes_accessed = (xt.size + n_pad) * 4 + col_slab.size * 4 + w1_slab.size * 2

    out = pl.pallas_call(
        _critic_kernel,
        out_shape=jax.ShapeDtypeStruct((1, n_pad), jnp.float32),
        grid=grid,
        in_specs=[
            pl.BlockSpec((IN_FEATURES, tile_b), lambda i: (0, i)),
            # Weight slabs: constant block index -> DMA'd once, VMEM-resident.
            pl.BlockSpec((HIDDEN, COL_LANES), lambda i: (0, 0)),
            pl.BlockSpec((HIDDEN, HIDDEN), lambda i: (0, 0)),
        ],
        out_specs=pl.BlockSpec((1, tile_b), lambda i: (0, i)),
        compiler_params=pltpu.CompilerParams(
            dimension_semantics=("parallel",)),  # batch tiles shard across v7x TCs
        cost_estimate=pl.CostEstimate(
            flops=flops, transcendentals=0, bytes_accessed=bytes_accessed),
    )(xt, col_slab, w1_slab)

    return out[0, :n].reshape(n, 1)


@jax.jit
def _xla_small_forward(x, col_slab, w1_slab):
    """Plain-XLA path mirroring the kernel numerics, for tiny batches."""
    w0 = col_slab[:, 0:IN_FEATURES]
    b0 = col_slab[:, 4]
    b1 = col_slab[:, 5]
    w2 = col_slab[:, 6]
    b2 = col_slab[0, 7]
    h0 = jnp.maximum(x @ w0.T + b0, 0.0)
    h1 = jnp.dot(h0.astype(jnp.bfloat16), w1_slab.T,
                 preferred_element_type=jnp.float32) + b1
    h1 = jnp.maximum(h1, 0.0)
    return (h1 @ w2 + b2)[:, None]


def critic_forward(states, packed, *, xla_below=0):
    """Equivalent of CriticModel.forward.

    states : (4,) flat env state (returns (1, 1), like the PyTorch module), or
             (N, 4) batch of states (returns (N, 1)).
    packed : output of _pack_params.
    xla_below : if N < xla_below, skip the Pallas launch and run plain XLA
                (recommended ~256 for single-state RL loops).
    """
    col_slab, w1_slab = packed
    x = jnp.asarray(states, jnp.float32)
    if x.ndim == 1:
        x = x.reshape(1, IN_FEATURES)   # _preprocessor: expand_dims(state, 0).float()
    n = x.shape[0]
    if n < xla_below:
        return _xla_small_forward(x, col_slab, w1_slab)
    return _forward_jit(x, col_slab, w1_slab, tile_b=_pick_tile(n))


def _reference_forward(states, params):
    """Plain-JAX f32 reference identical to the PyTorch forward."""
    (w0, b0), (w1, b1), (w2, b2) = params
    x = jnp.asarray(states, jnp.float32)
    if x.ndim == 1:
        x = x.reshape(1, IN_FEATURES)
    h0 = jnp.maximum(x @ w0.T + b0, 0.0)
    h1 = jnp.maximum(h0 @ w1.T + b1, 0.0)
    return h1 @ w2.T + b2


if __name__ == "__main__":
    key = jax.random.PRNGKey(0)
    k_param, k_state, k_batch = jax.random.split(key, 3)

    params = _make_params(k_param)
    packed = _pack_params(params)

    # bf16 on the 128x128 matmul -> loosened tolerances vs the f32 reference.
    RTOL, ATOL = 2e-2, 1e-2

    # 1) Single environment state (exact PyTorch-module semantics): (4,) -> (1, 1).
    state = jax.random.normal(k_state, (IN_FEATURES,), jnp.float32)
    v1 = jax.block_until_ready(critic_forward(state, packed))
    assert v1.shape == (1, 1), v1.shape
    np.testing.assert_allclose(
        np.asarray(v1), np.asarray(_reference_forward(state, params)),
        rtol=RTOL, atol=ATOL)

    # 2) Batched states: tile bucket 256 -> grid=(2,), weights stay VMEM-resident,
    #    both tiles run in parallel across the two v7x TensorCores.
    states = jax.random.normal(k_batch, (512, IN_FEATURES), jnp.float32)
    vb = jax.block_until_ready(critic_forward(states, packed))
    assert vb.shape == (512, 1), vb.shape
    np.testing.assert_allclose(
        np.asarray(vb), np.asarray(_reference_forward(states, params)),
        rtol=RTOL, atol=ATOL)

    # 3) Tiny-batch plain-XLA fallback (what an RL loop with batch=1 should use).
    v_xla = jax.block_until_ready(critic_forward(state, packed, xla_below=64))
    assert v_xla.shape == (1, 1), v_xla.shape
    np.testing.assert_allclose(np.asarray(v_xla), np.asarray(v1), rtol=RTOL, atol=ATOL)

    print("KERNEL_OK")
</pallas_src>

<mosaic_0001>
module attributes {stable_mosaic.version = 11 : i64} {
  func.func @_critic_kernel(%arg0: i32, %arg1: memref<4x128xf32, #tpu.memory_space<vmem>>, %arg2: memref<128x8xf32, #tpu.memory_space<vmem>>, %arg3: memref<128x128xbf16, #tpu.memory_space<vmem>>, %arg4: memref<1x128xf32, #tpu.memory_space<vmem>>) attributes {dimension_semantics = [#tpu.dimension_semantics<parallel>], iteration_bounds = array<i64: 1>, scalar_prefetch = 0 : i64, scratch_operands = 0 : i64, tpu.core_type = #tpu.core_type<tc>, window_params = [{transform_indices = @transform_0, window_bounds = array<i64: 4, 128>}, {pipeline_mode = #tpu.pipeline_mode<synchronous>, transform_indices = @transform_1, window_bounds = array<i64: 128, 8>}, {pipeline_mode = #tpu.pipeline_mode<synchronous>, transform_indices = @transform_2, window_bounds = array<i64: 128, 128>}, {transform_indices = @transform_3, window_bounds = array<i64: 1, 128>}]} {
    %c0 = arith.constant 0 : index
    %c0_0 = arith.constant 0 : index
    %0 = vector.load %arg1[%c0, %c0_0] : memref<4x128xf32, #tpu.memory_space<vmem>>, vector<4x128xf32>
    %c0_1 = arith.constant 0 : index
    %c0_2 = arith.constant 0 : index
    %1 = vector.load %arg2[%c0_1, %c0_2] : memref<128x8xf32, #tpu.memory_space<vmem>>, vector<128x4xf32>
    %c0_3 = arith.constant 0 : index
    %c4 = arith.constant 4 : index
    %2 = vector.load %arg2[%c0_3, %c4] : memref<128x8xf32, #tpu.memory_space<vmem>>, vector<128x1xf32>
    %c0_4 = arith.constant 0 : index
    %c5 = arith.constant 5 : index
    %3 = vector.load %arg2[%c0_4, %c5] : memref<128x8xf32, #tpu.memory_space<vmem>>, vector<128x1xf32>
    %c0_5 = arith.constant 0 : index
    %c6 = arith.constant 6 : index
    %4 = vector.load %arg2[%c0_5, %c6] : memref<128x8xf32, #tpu.memory_space<vmem>>, vector<128x1xf32>
    %c0_6 = arith.constant 0 : index
    %c7 = arith.constant 7 : index
    %5 = vector.load %arg2[%c0_6, %c7] : memref<128x8xf32, #tpu.memory_space<vmem>>, vector<1x1xf32>
    %6 = vector.extract_strided_slice %1 {offsets = [0, 0], sizes = [128, 1], strides = [1, 1]} : vector<128x4xf32> to vector<128x1xf32>
    %7 = vector.extract_strided_slice %0 {offsets = [0, 0], sizes = [1, 128], strides = [1, 1]} : vector<4x128xf32> to vector<1x128xf32>
    %8 = vector.broadcast %6 : vector<128x1xf32> to vector<128x128xf32>
    %9 = vector.broadcast %7 : vector<1x128xf32> to vector<128x128xf32>
    %10 = arith.mulf %8, %9 : vector<128x128xf32>
    %11 = vector.extract_strided_slice %1 {offsets = [0, 1], sizes = [128, 1], strides = [1, 1]} : vector<128x4xf32> to vector<128x1xf32>
    %12 = vector.extract_strided_slice %0 {offsets = [1, 0], sizes = [1, 128], strides = [1, 1]} : vector<4x128xf32> to vector<1x128xf32>
    %13 = vector.broadcast %11 : vector<128x1xf32> to vector<128x128xf32>
    %14 = vector.broadcast %12 : vector<1x128xf32> to vector<128x128xf32>
    %15 = arith.mulf %13, %14 : vector<128x128xf32>
    %16 = arith.addf %10, %15 : vector<128x128xf32>
    %17 = vector.extract_strided_slice %1 {offsets = [0, 2], sizes = [128, 1], strides = [1, 1]} : vector<128x4xf32> to vector<128x1xf32>
    %18 = vector.extract_strided_slice %0 {offsets = [2, 0], sizes = [1, 128], strides = [1, 1]} : vector<4x128xf32> to vector<1x128xf32>
    %19 = vector.broadcast %17 : vector<128x1xf32> to vector<128x128xf32>
    %20 = vector.broadcast %18 : vector<1x128xf32> to vector<128x128xf32>
    %21 = arith.mulf %19, %20 : vector<128x128xf32>
    %22 = arith.addf %16, %21 : vector<128x128xf32>
    %23 = vector.extract_strided_slice %1 {offsets = [0, 3], sizes = [128, 1], strides = [1, 1]} : vector<128x4xf32> to vector<128x1xf32>
    %24 = vector.extract_strided_slice %0 {offsets = [3, 0], sizes = [1, 128], strides = [1, 1]} : vector<4x128xf32> to vector<1x128xf32>
    %25 = vector.broadcast %23 : vector<128x1xf32> to vector<128x128xf32>
    %26 = vector.broadcast %24 : vector<1x128xf32> to vector<128x128xf32>
    %27 = arith.mulf %25, %26 : vector<128x128xf32>
    %28 = arith.addf %22, %27 : vector<128x128xf32>
    %29 = vector.broadcast %2 : vector<128x1xf32> to vector<128x128xf32>
    %30 = arith.addf %28, %29 : vector<128x128xf32>
    %cst = arith.constant 0.000000e+00 : f32
    %31 = vector.broadcast %cst : f32 to vector<128x128xf32>
    %32 = arith.maximumf %30, %31 : vector<128x128xf32>
    %c0_7 = arith.constant 0 : index
    %c0_8 = arith.constant 0 : index
    %33 = vector.load %arg3[%c0_7, %c0_8] : memref<128x128xbf16, #tpu.memory_space<vmem>>, vector<128x128xbf16>
    %34 = arith.truncf %32 : vector<128x128xf32> to vector<128x128xbf16>
    %cst_9 = arith.constant dense<0.000000e+00> : vector<128x128xf32>
    %35 = tpu.matmul %33, %34, %cst_9 {dimension_numbers = #tpu.dot_dimension_numbers<[1], [0], [0], [1], [0, 0, 1, 1], [], []>} : vector<128x128xbf16>, vector<128x128xbf16>, vector<128x128xf32> -> vector<128x128xf32>
    %36 = vector.broadcast %3 : vector<128x1xf32> to vector<128x128xf32>
    %37 = arith.addf %35, %36 : vector<128x128xf32>
    %cst_10 = arith.constant 0.000000e+00 : f32
    %38 = vector.broadcast %cst_10 : f32 to vector<128x128xf32>
    %39 = arith.maximumf %37, %38 : vector<128x128xf32>
    %40 = vector.broadcast %4 : vector<128x1xf32> to vector<128x128xf32>
    %41 = arith.mulf %40, %39 : vector<128x128xf32>
    %cst_11 = arith.constant dense<0.000000e+00> : vector<128xf32>
    %42 = vector.multi_reduction <add>, %41, %cst_11 [0] : vector<128x128xf32> to vector<128xf32>
    %43 = vector.shape_cast %42 : vector<128xf32> to vector<1x128xf32>
    %44 = vector.broadcast %5 : vector<1x1xf32> to vector<1x128xf32>
    %45 = arith.addf %43, %44 : vector<1x128xf32>
    %c0_12 = arith.constant 0 : index
    %c0_13 = arith.constant 0 : index
    %46 = vector.load %arg4[%c0_12, %c0_13] : memref<1x128xf32, #tpu.memory_space<vmem>>, vector<1x128xf32>
    tpu.vector_store %arg4[%c0_12, %c0_13], %45 {strides = array<i32>} : memref<1x128xf32, #tpu.memory_space<vmem>>, vector<1x128xf32>,
    return
  }
  func.func @transform_0(%arg0: i32) -> (i32, i32) {
    %c0_i32 = arith.constant 0 : i32
    %c0_i32_0 = arith.constant 0 : i32
    return %c0_i32, %arg0 : i32, i32
  }
  func.func @transform_1(%arg0: i32) -> (i32, i32) {
    %c0_i32 = arith.constant 0 : i32
    %c0_i32_0 = arith.constant 0 : i32
    %c0_i32_1 = arith.constant 0 : i32
    return %c0_i32, %c0_i32_0 : i32, i32
  }
  func.func @transform_2(%arg0: i32) -> (i32, i32) {
    %c0_i32 = arith.constant 0 : i32
    %c0_i32_0 = arith.constant 0 : i32
    %c0_i32_1 = arith.constant 0 : i32
    return %c0_i32, %c0_i32_0 : i32, i32
  }
  func.func @transform_3(%arg0: i32) -> (i32, i32) {
    %c0_i32 = arith.constant 0 : i32
    %c0_i32_0 = arith.constant 0 : i32
    return %c0_i32, %arg0 : i32, i32
  }
}

</mosaic_0001>

<llo_original>
// kernel: _forward_jit.1
$region0: #{_forward_jit.1}
  #allocation0 [shape = 'u32[]', space=smem, size = 0x4, offset = 0x4, fixed_abs, tag = 'smem constant byte address 0x4 - core index']
  #allocation1 [shape = 'u32[144,128]{1,0:T(1,128)}', space=vmem, size = 0x12000, scoped, tag = 'internal scratch']
  %s0 = inlined_call_operand.vmem [shape: f32[4,128], index: 0, kind: input, shape index: {}]
  %s1 = inlined_call_operand.vmem [shape: f32[128,8], index: 1, kind: input, shape index: {}]
  %s2 = inlined_call_operand.vmem [shape: bf16[128,128], index: 2, kind: input, shape index: {}]
  %s3 = inlined_call_operand.hbm [shape: f32[1,128], index: 3, kind: output, shape index: {}]
  %s4 = sld [smem:[#allocation0]]
  $region22: #{_forward_jit.1} parent=0
    _
  %s6 = ssub.s32 1, %s4
  %s7 = scalar_select 0, %s6, %s4
  $region1: #{_forward_jit.1} parent=0
    #allocation2 [shape = 'u8[512]{0}', space=vmem, size = 0x400, scoped, tag = 'output window, operand 0, single buffered']
    #allocation3 [shape = 's32[1]{0}', space=sflag, size = 0x4, scoped, tag = 'scoped memory for _forward_jit.1']
    %8 = vsyncpa [#allocation3], 0
    // Predicated region
    $region2: #{_forward_jit.1} parent=1 // pred_check
      _
    $region3: #{_forward_jit.1} parent=1 // pred_check_branch
      %10 = sbr.rel (0) target = $region5
    $region4: #{_forward_jit.1} parent=1 // pred_region
      _
    $region5: #{_forward_jit.1} parent=1 // pred_fallthru
      _
    // Predicated region
    $region6: #{_forward_jit.1} parent=1 // pred_check
      _
    $region7: #{_forward_jit.1} parent=1 // pred_check_branch
      %12 = sbr.rel (0) target = $region9
    $region8: #{_forward_jit.1} parent=1 // pred_region
      _
    $region9: #{_forward_jit.1} parent=1 // pred_fallthru
      _
    // Predicated region
    $region10: #{_forward_jit.1} parent=1 // pred_check
      _
    $region11: #{_forward_jit.1} parent=1 // pred_check_branch
      %14 = sbr.rel (0) target = $region13
    $region12: #{_forward_jit.1} parent=1 // pred_region
      _
    $region13: #{_forward_jit.1} parent=1 // pred_fallthru
      _
    %v16 = vld [vmem:[%s0] sm:$0xf]
    %v17 = vld [vmem:[%s1] sm:$0xff]
    %v18 = vld [vmem:[%s1 + $0x8] sm:$0xff]
    %v19 = vld [vmem:[%s1 + $0x10] sm:$0xff]
    %v20 = vld [vmem:[%s1 + $0x18] sm:$0xff]
    %v21 = vld [vmem:[%s1 + $0x20] sm:$0xff]
    %v22 = vld [vmem:[%s1 + $0x28] sm:$0xff]
    %v23 = vld [vmem:[%s1 + $0x30] sm:$0xff]
    %v24 = vld [vmem:[%s1 + $0x38] sm:$0xff]
    %v25 = vld [vmem:[%s1 + $0x40] sm:$0xff]
    %v26 = vld [vmem:[%s1 + $0x48] sm:$0xff]
    %v27 = vld [vmem:[%s1 + $0x50] sm:$0xff]
    %v28 = vld [vmem:[%s1 + $0x58] sm:$0xff]
    %v29 = vld [vmem:[%s1 + $0x60] sm:$0xff]
    %v30 = vld [vmem:[%s1 + $0x68] sm:$0xff]
    %v31 = vld [vmem:[%s1 + $0x70] sm:$0xff]
    %v32 = vld [vmem:[%s1 + $0x78] sm:$0xff]
    %v33 = vld [vmem:[%s1] sm:$0x1]
    %35 = vset.pattern.permute.xlu0 0
    %36 = vperm.xlu0 %35, %v17
    %v37 = vpop.permute.xlu0 %36
    %40 = vset.pattern.permute.xlu0 0
    %41 = vperm.xlu0 %40, %v18
    %v42 = vpop.permute.xlu0 %41
    %45 = vset.pattern.permute.xlu0 0
    %46 = vperm.xlu0 %45, %v19
    %v47 = vpop.permute.xlu0 %46
    %50 = vset.pattern.permute.xlu0 0
    %51 = vperm.xlu0 %50, %v20
    %v52 = vpop.permute.xlu0 %51
    %55 = vset.pattern.permute.xlu0 0
    %56 = vperm.xlu0 %55, %v21
    %v57 = vpop.permute.xlu0 %56
    %60 = vset.pattern.permute.xlu0 0
    %61 = vperm.xlu0 %60, %v22
    %v62 = vpop.permute.xlu0 %61
    %65 = vset.pattern.permute.xlu0 0
    %66 = vperm.xlu0 %65, %v23
    %v67 = vpop.permute.xlu0 %66
    %70 = vset.pattern.permute.xlu0 0
    %71 = vperm.xlu0 %70, %v24
    %v72 = vpop.permute.xlu0 %71
    %75 = vset.pattern.permute.xlu0 0
    %76 = vperm.xlu0 %75, %v25
    %v77 = vpop.permute.xlu0 %76
    %80 = vset.pattern.permute.xlu0 0
    %81 = vperm.xlu0 %80, %v26
    %v82 = vpop.permute.xlu0 %81
    %85 = vset.pattern.permute.xlu0 0
    %86 = vperm.xlu0 %85, %v27
    %v87 = vpop.permute.xlu0 %86
    %90 = vset.pattern.permute.xlu0 0
    %91 = vperm.xlu0 %90, %v28
    %v92 = vpop.permute.xlu0 %91
    %95 = vset.pattern.permute.xlu0 0
    %96 = vperm.xlu0 %95, %v29
    %v97 = vpop.permute.xlu0 %96
    %100 = vset.pattern.permute.xlu0 0
    %101 = vperm.xlu0 %100, %v30
    %v102 = vpop.permute.xlu0 %101
    %105 = vset.pattern.permute.xlu0 0
    %106 = vperm.xlu0 %105, %v31
    %v107 = vpop.permute.xlu0 %106
    %110 = vset.pattern.permute.xlu0 0
    %111 = vperm.xlu0 %110, %v32
    %v112 = vpop.permute.xlu0 %111
    %v114 = vlaneseq
    %v115 = vshrl.u32 %v114, 7
    %v116 = vsub.s32 0, %v115
    %v117 = vrot.slane %v16, %v116
    %v118 = vmul.f32 %v37, %v117
    %v119 = vmul.f32 %v42, %v117
    %v120 = vmul.f32 %v47, %v117
    %v121 = vmul.f32 %v52, %v117
    %v122 = vmul.f32 %v57, %v117
    %v123 = vmul.f32 %v62, %v117
    %v124 = vmul.f32 %v67, %v117
    %v125 = vmul.f32 %v72, %v117
    %v126 = vmul.f32 %v77, %v117
    %v127 = vmul.f32 %v82, %v117
    %v128 = vmul.f32 %v87, %v117
    %v129 = vmul.f32 %v92, %v117
    %v130 = vmul.f32 %v97, %v117
    %v131 = vmul.f32 %v102, %v117
    %v132 = vmul.f32 %v107, %v117
    %v133 = vmul.f32 %v112, %v117
    %134 = vset.pattern.permute.xlu0 1
    %135 = vperm.xlu0 %134, %v17
    %v136 = vpop.permute.xlu0 %135
    %138 = vset.pattern.permute.xlu0 1
    %139 = vperm.xlu0 %138, %v18
    %v140 = vpop.permute.xlu0 %139
    %142 = vset.pattern.permute.xlu0 1
    %143 = vperm.xlu0 %142, %v19
    %v144 = vpop.permute.xlu0 %143
    %146 = vset.pattern.permute.xlu0 1
    %147 = vperm.xlu0 %146, %v20
    %v148 = vpop.permute.xlu0 %147
    %150 = vset.pattern.permute.xlu0 1
    %151 = vperm.xlu0 %150, %v21
    %v152 = vpop.permute.xlu0 %151
    %154 = vset.pattern.permute.xlu0 1
    %155 = vperm.xlu0 %154, %v22
    %v156 = vpop.permute.xlu0 %155
    %158 = vset.pattern.permute.xlu0 1
    %159 = vperm.xlu0 %158, %v23
    %v160 = vpop.permute.xlu0 %159
    %162 = vset.pattern.permute.xlu0 1
    %163 = vperm.xlu0 %162, %v24
    %v164 = vpop.permute.xlu0 %163
    %166 = vset.pattern.permute.xlu0 1
    %167 = vperm.xlu0 %166, %v25
    %v168 = vpop.permute.xlu0 %167
    %170 = vset.pattern.permute.xlu0 1
    %171 = vperm.xlu0 %170, %v26
    %v172 = vpop.permute.xlu0 %171
    %174 = vset.pattern.permute.xlu0 1
    %175 = vperm.xlu0 %174, %v27
    %v176 = vpop.permute.xlu0 %175
    %178 = vset.pattern.permute.xlu0 1
    %179 = vperm.xlu0 %178, %v28
    %v180 = vpop.permute.xlu0 %179
    %182 = vset.pattern.permute.xlu0 1
    %183 = vperm.xlu0 %182, %v29
    %v184 = vpop.permute.xlu0 %183
    %186 = vset.pattern.permute.xlu0 1
    %187 = vperm.xlu0 %186, %v30
    %v188 = vpop.permute.xlu0 %187
    %190 = vset.pattern.permute.xlu0 1
    %191 = vperm.xlu0 %190, %v31
    %v192 = vpop.permute.xlu0 %191
    %194 = vset.pattern.permute.xlu0 1
    %195 = vperm.xlu0 %194, %v32
    %v196 = vpop.permute.xlu0 %195
    %v198 = vlaneseq
    %v199 = vshrl.u32 %v198, 7
    %v200 = vsub.s32 1, %v199
    %v201 = vrot.slane %v16, %v200
    %v202 = vmul.f32 %v136, %v201
    %v203 = vmul.f32 %v140, %v201
    %v204 = vmul.f32 %v144, %v201
    %v205 = vmul.f32 %v148, %v201
    %v206 = vmul.f32 %v152, %v201
    %v207 = vmul.f32 %v156, %v201
    %v208 = vmul.f32 %v160, %v201
    %v209 = vmul.f32 %v164, %v201
    %v210 = vmul.f32 %v168, %v201
    %v211 = vmul.f32 %v172, %v201
    %v212 = vmul.f32 %v176, %v201
    %v213 = vmul.f32 %v180, %v201
    %v214 = vmul.f32 %v184, %v201
    %v215 = vmul.f32 %v188, %v201
    %v216 = vmul.f32 %v192, %v201
    %v217 = vmul.f32 %v196, %v201
    %v218 = vadd.f32 %v118, %v202
    %v219 = vadd.f32 %v119, %v203
    %v220 = vadd.f32 %v120, %v204
    %v221 = vadd.f32 %v121, %v205
    %v222 = vadd.f32 %v122, %v206
    %v223 = vadd.f32 %v123, %v207
    %v224 = vadd.f32 %v124, %v208
    %v225 = vadd.f32 %v125, %v209
    %v226 = vadd.f32 %v126, %v210
    %v227 = vadd.f32 %v127, %v211
    %v228 = vadd.f32 %v128, %v212
    %v229 = vadd.f32 %v129, %v213
    %v230 = vadd.f32 %v130, %v214
    %v231 = vadd.f32 %v131, %v215
    %v232 = vadd.f32 %v132, %v216
    %v233 = vadd.f32 %v133, %v217
    %234 = vset.pattern.permute.xlu0 2
    %235 = vperm.xlu0 %234, %v17
    %v236 = vpop.permute.xlu0 %235
    %238 = vset.pattern.permute.xlu0 2
    %239 = vperm.xlu0 %238, %v18
    %v240 = vpop.permute.xlu0 %239
    %242 = vset.pattern.permute.xlu0 2
    %243 = vperm.xlu0 %242, %v19
    %v244 = vpop.permute.xlu0 %243
    %246 = vset.pattern.permute.xlu0 2
    %247 = vperm.xlu0 %246, %v20
    %v248 = vpop.permute.xlu0 %247
    %250 = vset.pattern.permute.xlu0 2
    %251 = vperm.xlu0 %250, %v21
    %v252 = vpop.permute.xlu0 %251
    %254 = vset.pattern.permute.xlu0 2
    %255 = vperm.xlu0 %254, %v22
    %v256 = vpop.permute.xlu0 %255
    %258 = vset.pattern.permute.xlu0 2
    %259 = vperm.xlu0 %258, %v23
    %v260 = vpop.permute.xlu0 %259
    %262 = vset.pattern.permute.xlu0 2
    %263 = vperm.xlu0 %262, %v24
    %v264 = vpop.permute.xlu0 %263
    %266 = vset.pattern.permute.xlu0 2
    %267 = vperm.xlu0 %266, %v25
    %v268 = vpop.permute.xlu0 %267
    %270 = vset.pattern.permute.xlu0 2
    %271 = vperm.xlu0 %270, %v26
    %v272 = vpop.permute.xlu0 %271
    %274 = vset.pattern.permute.xlu0 2
    %275 = vperm.xlu0 %274, %v27
    %v276 = vpop.permute.xlu0 %275
    %278 = vset.pattern.permute.xlu0 2
    %279 = vperm.xlu0 %278, %v28
    %v280 = vpop.permute.xlu0 %279
    %282 = vset.pattern.permute.xlu0 2
    %283 = vperm.xlu0 %282, %v29
    %v284 = vpop.permute.xlu0 %283
    %286 = vset.pattern.permute.xlu0 2
    %287 = vperm.xlu0 %286, %v30
    %v288 = vpop.permute.xlu0 %287
    %290 = vset.pattern.permute.xlu0 2
    %291 = vperm.xlu0 %290, %v31
    %v292 = vpop.permute.xlu0 %291
    %294 = vset.pattern.permute.xlu0 2
    %295 = vperm.xlu0 %294, %v32
    %v296 = vpop.permute.xlu0 %295
    %v298 = vlaneseq
    %v299 = vshrl.u32 %v298, 7
    %v300 = vsub.s32 2, %v299
    %v301 = vrot.slane %v16, %v300
    %v302 = vmul.f32 %v236, %v301
    %v303 = vmul.f32 %v240, %v301
    %v304 = vmul.f32 %v244, %v301
    %v305 = vmul.f32 %v248, %v301
    %v306 = vmul.f32 %v252, %v301
    %v307 = vmul.f32 %v256, %v301
    %v308 = vmul.f32 %v260, %v301
    %v309 = vmul.f32 %v264, %v301
    %v310 = vmul.f32 %v268, %v301
    %v311 = vmul.f32 %v272, %v301
    %v312 = vmul.f32 %v276, %v301
    %v313 = vmul.f32 %v280, %v301
    %v314 = vmul.f32 %v284, %v301
    %v315 = vmul.f32 %v288, %v301
    %v316 = vmul.f32 %v292, %v301
    %v317 = vmul.f32 %v296, %v301
    %v318 = vadd.f32 %v218, %v302
    %v319 = vadd.f32 %v219, %v303
    %v320 = vadd.f32 %v220, %v304
    %v321 = vadd.f32 %v221, %v305
    %v322 = vadd.f32 %v222, %v306
    %v323 = vadd.f32 %v223, %v307
    %v324 = vadd.f32 %v224, %v308
    %v325 = vadd.f32 %v225, %v309
    %v326 = vadd.f32 %v226, %v310
    %v327 = vadd.f32 %v227, %v311
    %v328 = vadd.f32 %v228, %v312
    %v329 = vadd.f32 %v229, %v313
    %v330 = vadd.f32 %v230, %v314
    %v331 = vadd.f32 %v231, %v315
    %v332 = vadd.f32 %v232, %v316
    %v333 = vadd.f32 %v233, %v317
    %334 = vset.pattern.permute.xlu0 3
    %335 = vperm.xlu0 %334, %v17
    %v336 = vpop.permute.xlu0 %335
    %338 = vset.pattern.permute.xlu0 3
    %339 = vperm.xlu0 %338, %v18
    %v340 = vpop.permute.xlu0 %339
    %342 = vset.pattern.permute.xlu0 3
    %343 = vperm.xlu0 %342, %v19
    %v344 = vpop.permute.xlu0 %343
    %346 = vset.pattern.permute.xlu0 3
    %347 = vperm.xlu0 %346, %v20
    %v348 = vpop.permute.xlu0 %347
    %350 = vset.pattern.permute.xlu0 3
    %351 = vperm.xlu0 %350, %v21
    %v352 = vpop.permute.xlu0 %351
    %354 = vset.pattern.permute.xlu0 3
    %355 = vperm.xlu0 %354, %v22
    %v356 = vpop.permute.xlu0 %355
    %358 = vset.pattern.permute.xlu0 3
    %359 = vperm.xlu0 %358, %v23
    %v360 = vpop.permute.xlu0 %359
    %362 = vset.pattern.permute.xlu0 3
    %363 = vperm.xlu0 %362, %v24
    %v364 = vpop.permute.xlu0 %363
    %366 = vset.pattern.permute.xlu0 3
    %367 = vperm.xlu0 %366, %v25
    %v368 = vpop.permute.xlu0 %367
    %370 = vset.pattern.permute.xlu0 3
    %371 = vperm.xlu0 %370, %v26
    %v372 = vpop.permute.xlu0 %371
    %374 = vset.pattern.permute.xlu0 3
    %375 = vperm.xlu0 %374, %v27
    %v376 = vpop.permute.xlu0 %375
    %378 = vset.pattern.permute.xlu0 3
    %379 = vperm.xlu0 %378, %v28
    %v380 = vpop.permute.xlu0 %379
    %382 = vset.pattern.permute.xlu0 3
    %383 = vperm.xlu0 %382, %v29
    %v384 = vpop.permute.xlu0 %383
    %386 = vset.pattern.permute.xlu0 3
    %387 = vperm.xlu0 %386, %v30
    %v388 = vpop.permute.xlu0 %387
    %390 = vset.pattern.permute.xlu0 3
    %391 = vperm.xlu0 %390, %v31
    %v392 = vpop.permute.xlu0 %391
    %394 = vset.pattern.permute.xlu0 3
    %395 = vperm.xlu0 %394, %v32
    %v396 = vpop.permute.xlu0 %395
    %v398 = vlaneseq
    %v399 = vshrl.u32 %v398, 7
    %v400 = vsub.s32 3, %v399
    %v401 = vrot.slane %v16, %v400
    %v402 = vmul.f32 %v336, %v401
    %v403 = vmul.f32 %v340, %v401
    %v404 = vmul.f32 %v344, %v401
    %v405 = vmul.f32 %v348, %v401
    %v406 = vmul.f32 %v352, %v401
    %v407 = vmul.f32 %v356, %v401
    %v408 = vmul.f32 %v360, %v401
    %v409 = vmul.f32 %v364, %v401
    %v410 = vmul.f32 %v368, %v401
    %v411 = vmul.f32 %v372, %v401
    %v412 = vmul.f32 %v376, %v401
    %v413 = vmul.f32 %v380, %v401
    %v414 = vmul.f32 %v384, %v401
    %v415 = vmul.f32 %v388, %v401
    %v416 = vmul.f32 %v392, %v401
    %v417 = vmul.f32 %v396, %v401
    %v418 = vadd.f32 %v318, %v402
    %v419 = vadd.f32 %v319, %v403
    %v420 = vadd.f32 %v320, %v404
    %v421 = vadd.f32 %v321, %v405
    %v422 = vadd.f32 %v322, %v406
    %v423 = vadd.f32 %v323, %v407
    %v424 = vadd.f32 %v324, %v408
    %v425 = vadd.f32 %v325, %v409
    %v426 = vadd.f32 %v326, %v410
    %v427 = vadd.f32 %v327, %v411
    %v428 = vadd.f32 %v328, %v412
    %v429 = vadd.f32 %v329, %v413
    %v430 = vadd.f32 %v330, %v414
    %v431 = vadd.f32 %v331, %v415
    %v432 = vadd.f32 %v332, %v416
    %v433 = vadd.f32 %v333, %v417
    %434 = vset.pattern.permute.xlu0 4
    %435 = vperm.xlu0 %434, %v17
    %v436 = vpop.permute.xlu0 %435
    %438 = vset.pattern.permute.xlu0 4
    %439 = vperm.xlu0 %438, %v18
    %v440 = vpop.permute.xlu0 %439
    %442 = vset.pattern.permute.xlu0 4
    %443 = vperm.xlu0 %442, %v19
    %v444 = vpop.permute.xlu0 %443
    %446 = vset.pattern.permute.xlu0 4
    %447 = vperm.xlu0 %446, %v20
    %v448 = vpop.permute.xlu0 %447
    %450 = vset.pattern.permute.xlu0 4
    %451 = vperm.xlu0 %450, %v21
    %v452 = vpop.permute.xlu0 %451
    %454 = vset.pattern.permute.xlu0 4
    %455 = vperm.xlu0 %454, %v22
    %v456 = vpop.permute.xlu0 %455
    %458 = vset.pattern.permute.xlu0 4
    %459 = vperm.xlu0 %458, %v23
    %v460 = vpop.permute.xlu0 %459
    %462 = vset.pattern.permute.xlu0 4
    %463 = vperm.xlu0 %462, %v24
    %v464 = vpop.permute.xlu0 %463
    %466 = vset.pattern.permute.xlu0 4
    %467 = vperm.xlu0 %466, %v25
    %v468 = vpop.permute.xlu0 %467
    %470 = vset.pattern.permute.xlu0 4
    %471 = vperm.xlu0 %470, %v26
    %v472 = vpop.permute.xlu0 %471
    %474 = vset.pattern.permute.xlu0 4
    %475 = vperm.xlu0 %474, %v27
    %v476 = vpop.permute.xlu0 %475
    %478 = vset.pattern.permute.xlu0 4
    %479 = vperm.xlu0 %478, %v28
    %v480 = vpop.permute.xlu0 %479
    %482 = vset.pattern.permute.xlu0 4
    %483 = vperm.xlu0 %482, %v29
    %v484 = vpop.permute.xlu0 %483
    %486 = vset.pattern.permute.xlu0 4
    %487 = vperm.xlu0 %486, %v30
    %v488 = vpop.permute.xlu0 %487
    %490 = vset.pattern.permute.xlu0 4
    %491 = vperm.xlu0 %490, %v31
    %v492 = vpop.permute.xlu0 %491
    %494 = vset.pattern.permute.xlu0 4
    %495 = vperm.xlu0 %494, %v32
    %v496 = vpop.permute.xlu0 %495
    %v498 = vadd.f32 %v418, %v436
    %v499 = vadd.f32 %v419, %v440
    %v500 = vadd.f32 %v420, %v444
    %v501 = vadd.f32 %v421, %v448
    %v502 = vadd.f32 %v422, %v452
    %v503 = vadd.f32 %v423, %v456
    %v504 = vadd.f32 %v424, %v460
    %v505 = vadd.f32 %v425, %v464
    %v506 = vadd.f32 %v426, %v468
    %v507 = vadd.f32 %v427, %v472
    %v508 = vadd.f32 %v428, %v476
    %v509 = vadd.f32 %v429, %v480
    %v510 = vadd.f32 %v430, %v484
    %v511 = vadd.f32 %v431, %v488
    %v512 = vadd.f32 %v432, %v492
    %v513 = vadd.f32 %v433, %v496
    %v514 = vmax.f32 %v498, 0.0
    %v515 = vmax.f32 %v499, 0.0
    %v516 = vmax.f32 %v500, 0.0
    %v517 = vmax.f32 %v501, 0.0
    %v518 = vmax.f32 %v502, 0.0
    %v519 = vmax.f32 %v503, 0.0
    %v520 = vmax.f32 %v504, 0.0
    %v521 = vmax.f32 %v505, 0.0
    %v522 = vmax.f32 %v506, 0.0
    %v523 = vmax.f32 %v507, 0.0
    %v524 = vmax.f32 %v508, 0.0
    %v525 = vmax.f32 %v509, 0.0
    %v526 = vmax.f32 %v510, 0.0
    %v527 = vmax.f32 %v511, 0.0
    %v528 = vmax.f32 %v512, 0.0
    %v529 = vmax.f32 %v513, 0.0
    %v530 = vld [vmem:[%s2] sm:$0xf]
    %v531 = vld [vmem:[%s2 + $0x4] sm:$0xf]
    %v532 = vld [vmem:[%s2 + $0x8] sm:$0xf]
    %v533 = vld [vmem:[%s2 + $0xc] sm:$0xf]
    %v534 = vld [vmem:[%s2 + $0x10] sm:$0xf]
    %v535 = vld [vmem:[%s2 + $0x14] sm:$0xf]
    %v536 = vld [vmem:[%s2 + $0x18] sm:$0xf]
    %v537 = vld [vmem:[%s2 + $0x1c] sm:$0xf]
    %v538 = vld [vmem:[%s2 + $0x20] sm:$0xf]
    %v539 = vld [vmem:[%s2 + $0x24] sm:$0xf]
    %v540 = vld [vmem:[%s2 + $0x28] sm:$0xf]
    %v541 = vld [vmem:[%s2 + $0x2c] sm:$0xf]
    %v542 = vld [vmem:[%s2 + $0x30] sm:$0xf]
    %v543 = vld [vmem:[%s2 + $0x34] sm:$0xf]
    %v544 = vld [vmem:[%s2 + $0x38] sm:$0xf]
    %v545 = vld [vmem:[%s2 + $0x3c] sm:$0xf]
    %v546 = vpack.c.bf16 %v515, %v514
    %v547 = vpack.c.bf16 %v517, %v516
    %v548 = vpack.c.bf16 %v519, %v518
    %v549 = vpack.c.bf16 %v521, %v520
    %v550 = vpack.c.bf16 %v523, %v522
    %v551 = vpack.c.bf16 %v525, %v524
    %v552 = vpack.c.bf16 %v527, %v526
    %v553 = vpack.c.bf16 %v529, %v528
    %554 = vset.pattern.permute.xlu0 5
    %555 = vperm.xlu0 %554, %v17
    %v556 = vpop.permute.xlu0 %555
    %558 = vset.pattern.permute.xlu0 5
    %559 = vperm.xlu0 %558, %v18
    %v560 = vpop.permute.xlu0 %559
    %562 = vset.pattern.permute.xlu0 5
    %563 = vperm.xlu0 %562, %v19
    %v564 = vpop.permute.xlu0 %563
    %566 = vset.pattern.permute.xlu0 5
    %567 = vperm.xlu0 %566, %v20
    %v568 = vpop.permute.xlu0 %567
    %570 = vset.pattern.permute.xlu0 5
    %571 = vperm.xlu0 %570, %v21
    %v572 = vpop.permute.xlu0 %571
    %574 = vset.pattern.permute.xlu0 5
    %575 = vperm.xlu0 %574, %v22
    %v576 = vpop.permute.xlu0 %575
    %578 = vset.pattern.permute.xlu0 5
    %579 = vperm.xlu0 %578, %v23
    %v580 = vpop.permute.xlu0 %579
    %582 = vset.pattern.permute.xlu0 5
    %583 = vperm.xlu0 %582, %v24
    %v584 = vpop.permute.xlu0 %583
    %586 = vset.pattern.permute.xlu0 5
    %587 = vperm.xlu0 %586, %v25
    %v588 = vpop.permute.xlu0 %587
    %590 = vset.pattern.permute.xlu0 5
    %591 = vperm.xlu0 %590, %v26
    %v592 = vpop.permute.xlu0 %591
    %594 = vset.pattern.permute.xlu0 5
    %595 = vperm.xlu0 %594, %v27
    %v596 = vpop.permute.xlu0 %595
    %598 = vset.pattern.permute.xlu0 5
    %599 = vperm.xlu0 %598, %v28
    %v600 = vpop.permute.xlu0 %599
    %602 = vset.pattern.permute.xlu0 5
    %603 = vperm.xlu0 %602, %v29
    %v604 = vpop.permute.xlu0 %603
    %606 = vset.pattern.permute.xlu0 5
    %607 = vperm.xlu0 %606, %v30
    %v608 = vpop.permute.xlu0 %607
    %610 = vset.pattern.permute.xlu0 5
    %611 = vperm.xlu0 %610, %v31
    %v612 = vpop.permute.xlu0 %611
    %614 = vset.pattern.permute.xlu0 5
    %615 = vperm.xlu0 %614, %v32
    %v616 = vpop.permute.xlu0 %615
    %v634 = vunpack.c.l.b16 %v530
    %v635 = vunpack.c.l.b16 %v531
    %v636 = vunpack.c.l.b16 %v532
    %v637 = vunpack.c.l.b16 %v533
    %v638 = vunpack.c.l.b16 %v534
    %v639 = vunpack.c.l.b16 %v535
    %v640 = vunpack.c.l.b16 %v536
    %v641 = vunpack.c.l.b16 %v537
    %v642 = vunpack.c.l.b16 %v538
    %v643 = vunpack.c.l.b16 %v539
    %v644 = vunpack.c.l.b16 %v540
    %v645 = vunpack.c.l.b16 %v541
    %v646 = vunpack.c.l.b16 %v542
    %v647 = vunpack.c.l.b16 %v543
    %v648 = vunpack.c.l.b16 %v544
    %v649 = vunpack.c.l.b16 %v545
    %v650 = vpack.c.b16 %v635, %v634
    %v651 = vpack.c.b16 %v637, %v636
    %v652 = vpack.c.b16 %v639, %v638
    %v653 = vpack.c.b16 %v641, %v640
    %v654 = vpack.c.b16 %v643, %v642
    %v655 = vpack.c.b16 %v645, %v644
    %v656 = vpack.c.b16 %v647, %v646
    %v657 = vpack.c.b16 %v649, %v648
    %666 = vmatprep.subr.bf16.mxu0 0
    %667 = vmatpush1.bf16.msra.mxu0 %v546
    %668 = vmatprep.subr.bf16.mxu0 0
    %669 = vmatpush1.bf16.msra.mxu0 %v547
    %670 = vmatprep.subr.bf16.mxu0 0
    %671 = vmatpush1.bf16.msra.mxu0 %v548
    %672 = vmatprep.subr.bf16.mxu0 0
    %673 = vmatpush1.bf16.msra.mxu0 %v549
    %674 = vmatprep.subr.bf16.mxu0 0
    %675 = vmatpush1.bf16.msra.mxu0 %v550
    %676 = vmatprep.subr.bf16.mxu0 0
    %677 = vmatpush1.bf16.msra.mxu0 %v551
    %678 = vmatprep.subr.bf16.mxu0 0
    %679 = vmatpush1.bf16.msra.mxu0 %v552
    %680 = vmatprep.subr.bf16.mxu0 0
    %681 = vmatpush1.bf16.msra.mxu0 %v553
    %682 = vmatprep.subr.bf16.mxu0 0
    %683 = vmatpush1.bf16.msra.mxu0 0
    %684 = vmatprep.subr.bf16.mxu0 0
    %685 = vmatpush1.bf16.msra.mxu0 0
    %686 = vmatprep.subr.bf16.mxu0 0
    %687 = vmatpush1.bf16.msra.mxu0 0
    %688 = vmatprep.subr.bf16.mxu0 0
    %689 = vmatpush1.bf16.msra.mxu0 0
    %690 = vmatprep.subr.bf16.mxu0 0
    %691 = vmatpush1.bf16.msra.mxu0 0
    %692 = vmatprep.subr.bf16.mxu0 0
    %693 = vmatpush1.bf16.msra.mxu0 0
    %694 = vmatprep.subr.bf16.mxu0 0
    %695 = vmatpush1.bf16.msra.mxu0 0
    %696 = vmatprep.subr.bf16.mxu0 0
    %697 = vmatpush1.bf16.msra.mxu0 0
    %698 = vmatprep.mubr.bf16.mxu0 0
    %699 = vmatmul.mubr.bf16.gmra.mrb[0].mxu0 %v650
    %v700 = vpop.f32.mrb[0].mxu0
    %v701 = vadd.f32 %v556, %v700
    %v702 = vpop.f32.mrb[0].mxu0
    %v703 = vpop.f32.mrb[0].mxu0
    %v704 = vadd.f32 %v560, %v703
    %v705 = vpop.f32.mrb[0].mxu0
    %706 = vmatprep.mubr.bf16.mxu0 0
    %707 = vmatmul.mubr.bf16.gmra.mrb[0].mxu0 %v651
    %v708 = vpop.f32.mrb[0].mxu0
    %v709 = vadd.f32 %v564, %v708
    %v710 = vpop.f32.mrb[0].mxu0
    %v711 = vpop.f32.mrb[0].mxu0
    %v712 = vadd.f32 %v568, %v711
    %v713 = vpop.f32.mrb[0].mxu0
    %714 = vmatprep.mubr.bf16.mxu0 0
    %715 = vmatmul.mubr.bf16.gmra.mrb[0].mxu0 %v652
    %v716 = vpop.f32.mrb[0].mxu0
    %v717 = vadd.f32 %v572, %v716
    %v718 = vpop.f32.mrb[0].mxu0
    %v719 = vpop.f32.mrb[0].mxu0
    %v720 = vadd.f32 %v576, %v719
    %v721 = vpop.f32.mrb[0].mxu0
    %722 = vmatprep.mubr.bf16.mxu0 0
    %723 = vmatmul.mubr.bf16.gmra.mrb[0].mxu0 %v653
    %v724 = vpop.f32.mrb[0].mxu0
    %v725 = vadd.f32 %v580, %v724
    %v726 = vpop.f32.mrb[0].mxu0
    %v727 = vpop.f32.mrb[0].mxu0
    %v728 = vadd.f32 %v584, %v727
    %v729 = vpop.f32.mrb[0].mxu0
    %730 = vmatprep.mubr.bf16.mxu0 0
    %731 = vmatmul.mubr.bf16.gmra.mrb[0].mxu0 %v654
    %v732 = vpop.f32.mrb[0].mxu0
    %v733 = vadd.f32 %v588, %v732
    %v734 = vpop.f32.mrb[0].mxu0
    %v735 = vpop.f32.mrb[0].mxu0
    %v736 = vadd.f32 %v592, %v735
    %v737 = vpop.f32.mrb[0].mxu0
    %738 = vmatprep.mubr.bf16.mxu0 0
    %739 = vmatmul.mubr.bf16.gmra.mrb[0].mxu0 %v655
    %v740 = vpop.f32.mrb[0].mxu0
    %v741 = vadd.f32 %v596, %v740
    %v742 = vpop.f32.mrb[0].mxu0
    %v743 = vpop.f32.mrb[0].mxu0
    %v744 = vadd.f32 %v600, %v743
    %v745 = vpop.f32.mrb[0].mxu0
    %746 = vmatprep.mubr.bf16.mxu0 0
    %747 = vmatmul.mubr.bf16.gmra.mrb[0].mxu0 %v656
    %v748 = vpop.f32.mrb[0].mxu0
    %v749 = vadd.f32 %v604, %v748
    %v750 = vpop.f32.mrb[0].mxu0
    %v751 = vpop.f32.mrb[0].mxu0
    %v752 = vadd.f32 %v608, %v751
    %v753 = vpop.f32.mrb[0].mxu0
    %754 = vmatprep.mubr.bf16.mxu0 0
    %755 = vmatmul.mubr.bf16.gmra.mrb[0].mxu0 %v657
    %v756 = vpop.f32.mrb[0].mxu0
    %v757 = vadd.f32 %v612, %v756
    %v758 = vpop.f32.mrb[0].mxu0
    %v759 = vpop.f32.mrb[0].mxu0
    %v760 = vadd.f32 %v616, %v759
    %v761 = vpop.f32.mrb[0].mxu0
    %762 = vdwg.mxu0
    %v763 = vmax.f32 %v701, 0.0
    %v764 = vmax.f32 %v704, 0.0
    %v765 = vmax.f32 %v709, 0.0
    %v766 = vmax.f32 %v712, 0.0
    %v767 = vmax.f32 %v717, 0.0
    %v768 = vmax.f32 %v720, 0.0
    %v769 = vmax.f32 %v725, 0.0
    %v770 = vmax.f32 %v728, 0.0
    %v771 = vmax.f32 %v733, 0.0
    %v772 = vmax.f32 %v736, 0.0
    %v773 = vmax.f32 %v741, 0.0
    %v774 = vmax.f32 %v744, 0.0
    %v775 = vmax.f32 %v749, 0.0
    %v776 = vmax.f32 %v752, 0.0
    %v777 = vmax.f32 %v757, 0.0
    %v778 = vmax.f32 %v760, 0.0
    %779 = vset.pattern.permute.xlu0 6
    %780 = vperm.xlu0 %779, %v17
    %v781 = vpop.permute.xlu0 %780
    %783 = vset.pattern.permute.xlu0 6
    %784 = vperm.xlu0 %783, %v18
    %v785 = vpop.permute.xlu0 %784
    %787 = vset.pattern.permute.xlu0 6
    %788 = vperm.xlu0 %787, %v19
    %v789 = vpop.permute.xlu0 %788
    %791 = vset.pattern.permute.xlu0 6
    %792 = vperm.xlu0 %791, %v20
    %v793 = vpop.permute.xlu0 %792
    %795 = vset.pattern.permute.xlu0 6
    %796 = vperm.xlu0 %795, %v21
    %v797 = vpop.permute.xlu0 %796
    %799 = vset.pattern.permute.xlu0 6
    %800 = vperm.xlu0 %799, %v22
    %v801 = vpop.permute.xlu0 %800
    %803 = vset.pattern.permute.xlu0 6
    %804 = vperm.xlu0 %803, %v23
    %v805 = vpop.permute.xlu0 %804
    %807 = vset.pattern.permute.xlu0 6
    %808 = vperm.xlu0 %807, %v24
    %v809 = vpop.permute.xlu0 %808
    %811 = vset.pattern.permute.xlu0 6
    %812 = vperm.xlu0 %811, %v25
    %v813 = vpop.permute.xlu0 %812
    %815 = vset.pattern.permute.xlu0 6
    %816 = vperm.xlu0 %815, %v26
    %v817 = vpop.permute.xlu0 %816
    %819 = vset.pattern.permute.xlu0 6
    %820 = vperm.xlu0 %819, %v27
    %v821 = vpop.permute.xlu0 %820
    %823 = vset.pattern.permute.xlu0 6
    %824 = vperm.xlu0 %823, %v28
    %v825 = vpop.permute.xlu0 %824
    %827 = vset.pattern.permute.xlu0 6
    %828 = vperm.xlu0 %827, %v29
    %v829 = vpop.permute.xlu0 %828
    %831 = vset.pattern.permute.xlu0 6
    %832 = vperm.xlu0 %831, %v30
    %v833 = vpop.permute.xlu0 %832
    %835 = vset.pattern.permute.xlu0 6
    %836 = vperm.xlu0 %835, %v31
    %v837 = vpop.permute.xlu0 %836
    %839 = vset.pattern.permute.xlu0 6
    %840 = vperm.xlu0 %839, %v32
    %v841 = vpop.permute.xlu0 %840
    %v843 = vmul.f32 %v781, %v763
    %v844 = vmul.f32 %v785, %v764
    %v845 = vmul.f32 %v789, %v765
    %v846 = vmul.f32 %v793, %v766
    %v847 = vmul.f32 %v797, %v767
    %v848 = vmul.f32 %v801, %v768
    %v849 = vmul.f32 %v805, %v769
    %v850 = vmul.f32 %v809, %v770
    %v851 = vmul.f32 %v813, %v771
    %v852 = vmul.f32 %v817, %v772
    %v853 = vmul.f32 %v821, %v773
    %v854 = vmul.f32 %v825, %v774
    %v855 = vmul.f32 %v829, %v775
    %v856 = vmul.f32 %v833, %v776
    %v857 = vmul.f32 %v837, %v777
    %v858 = vmul.f32 %v841, %v778
    %v859 = vadd.f32 %v843, %v844
    %v860 = vadd.f32 %v859, %v845
    %v861 = vadd.f32 %v860, %v846
    %v862 = vadd.f32 %v861, %v847
    %v863 = vadd.f32 %v862, %v848
    %v864 = vadd.f32 %v863, %v849
    %v865 = vadd.f32 %v864, %v850
    %v866 = vadd.f32 %v865, %v851
    %v867 = vadd.f32 %v866, %v852
    %v868 = vadd.f32 %v867, %v853
    %v869 = vadd.f32 %v868, %v854
    %v870 = vadd.f32 %v869, %v855
    %v871 = vadd.f32 %v870, %v856
    %v872 = vadd.f32 %v871, %v857
    %v873 = vadd.f32 %v872, %v858
    %v874 = vrot.slane %v873, 4
    %v875 = vadd.f32 %v873, %v874
    %v876 = vrot.slane %v875, 2
    %v877 = vadd.f32 %v875, %v876
    %v878 = vrot.slane %v877, 1
    %v879 = vadd.f32 %v877, %v878
    %881 = vset.pattern.permute.xlu0 7
    %882 = vperm.xlu0 %881, %v33
    %v883 = vpop.permute.xlu0 %882
    %v885 = vadd.f32 %v879, %v883
    %886 = vst [vmem:[#allocation2] sm:$0x1] %v885
    // Predicated region
    $region14: #{_forward_jit.1} parent=1 // pred_check
      _
    $region15: #{_forward_jit.1} parent=1 // pred_check_branch
      %888 = sbr.rel (0) target = $region17
    $region16: #{_forward_jit.1} parent=1 // pred_region
      %s890 = ssub.s32 16, 16
      %891 = vsyncadd [#allocation3], %s890
      %s893 = sshll.u32 [#allocation2], 4
      %s894 = int_to_ptr.vmem [resolvable:$true] %s893
      %896 = dma.vmem_to_hbm [thread:$0]  %s894, 16, %s3, [#allocation3]
    $region17: #{_forward_jit.1} parent=1 // pred_fallthru
      _
    // Predicated region
    $region18: #{_forward_jit.1} parent=1 // pred_check
      _
    $region19: #{_forward_jit.1} parent=1 // pred_check_branch
      %898 = sbr.rel (0) target = $region21
    $region20: #{_forward_jit.1} parent=1 // pred_region
      %899 = dma.done [#allocation3], 16
    $region21: #{_forward_jit.1} parent=1 // pred_fallthru
      _
    %900 = vsyncpa [#allocation3], 1

</llo_original>
